<compile_context>
chip_gen: v6e
topology: v6e:2x2x1
jax: 0.10.0
libtpu: 0.0.40
codegen_flags: <defaults>
</compile_context>

<pallas_src>
import functools

import jax
import jax.numpy as jnp
from jax import lax
from jax.experimental import pallas as pl
from jax.experimental.pallas import tpu as pltpu


def task_spliter_kernel(feat_ref, w1t_ref, b1_ref, w2_ref, b2_ref,
                        rw_ref, gamma_ref, beta_ref, smap_ref, p_ref,
                        out_ref, *, hw_true, group_size):
    x_bf = feat_ref[...]                                   # (Bc, IN, HWp) bf16
    x_f32 = x_bf.astype(jnp.float32)

    # --- squeeze-excitation prologue: VPU multiplies + XLU reduces (no MXU) ---
    inv_hw = 1.0 / float(hw_true)
    # adaptive_avg_pool2d -> per-channel spatial mean (padding lanes are zero)
    avg = jnp.sum(x_f32, axis=2, keepdims=True) * inv_hw            # (Bc, IN, 1)

    # la_conv1 (+ReLU): sublane reduce of avg * W1^T
    h1 = jnp.sum(avg * w1t_ref[...][None], axis=1, keepdims=True)   # (Bc, 1, MID)
    h1 = jnp.maximum(h1 + b1_ref[...][None], 0.0)

    # la_conv2 (+sigmoid): lane reduce of W2 * h1
    att = jnp.sum(w2_ref[...][None] * h1, axis=2, keepdims=True)    # (Bc, S, 1)
    att = jax.nn.sigmoid(att + b2_ref[...][None])

    # scale[i] = att[i // F]  via indicator matrix (sublane reduce)
    scale = jnp.sum(att * smap_ref[...][None], axis=1, keepdims=True)   # (Bc, 1, IN)
    conv_w = (rw_ref[...][None] * scale).astype(jnp.bfloat16)           # (Bc, F, IN)

    # --- dynamic 1x1 conv: the one real MXU matmul (bf16 in, f32 accumulate) ---
    y = jnp.einsum('bfi,bix->bfx', conv_w, x_bf,
                   preferred_element_type=jnp.float32)                  # (Bc, F, HWp)

    # --- GroupNorm(16, F), eps=1e-5, biased variance ---
    # Per-channel sums, then per-channel group stats via P = gmapT @ gmap
    # (two independent tiny matmuls instead of four dependent ones).
    s1 = jnp.sum(y, axis=2, keepdims=True)                              # (Bc, F, 1)
    s2 = jnp.sum(y * y, axis=2, keepdims=True)                          # (Bc, F, 1)
    bc, f_ch, _ = s1.shape
    p_b = jnp.broadcast_to(p_ref[...][None], (bc, f_ch, f_ch))
    gs1 = jnp.einsum('bfg,bgo->bfo', p_b, s1, preferred_element_type=jnp.float32)
    gs2 = jnp.einsum('bfg,bgo->bfo', p_b, s2, preferred_element_type=jnp.float32)
    n = float(group_size * hw_true)                                     # elems / group
    mean_c = gs1 * (1.0 / n)
    # one-pass variance; clamp at 0 to guard cancellation before rsqrt
    var_c = jnp.maximum(gs2 * (1.0 / n) - mean_c * mean_c, 0.0)
    inv_c = lax.rsqrt(var_c + 1e-5)
    yn = (y - mean_c) * (inv_c * gamma_ref[...][None]) + beta_ref[...][None]

    # --- SiLU ---
    out_ref[...] = yn * jax.nn.sigmoid(yn)


def task_spliter_forward(feat, params, *, batch_block=None):
    """feat: (B, in_channels, H, W) float32 (NCHW, like the PyTorch module)."""
    B, C, H, W = feat.shape
    Fc = params["rw"].shape[0]
    S = params["w2"].shape[0]
    G = 16
    gF = Fc // G
    HW = H * W
    HWp = ((HW + 127) // 128) * 128          # keep output lane-dense

    feat_flat = feat.reshape(B, C, HW).astype(jnp.bfloat16)
    if HWp != HW:
        feat_flat = jnp.pad(feat_flat, ((0, 0), (0, 0), (0, HWp - HW)))

    # Batch blocking: default = (up to) 2 parallel grid steps so v7x's two TCs
    # each take half the batch; on single-TC v5e/v6e this costs at most one extra
    # grid step vs a full merge. Set batch_block=B to fully merge on v5e/v6e.
    if batch_block is None:
        batch_block = (B + 1) // 2 if B > 1 else 1
    if B % batch_block != 0:
        batch_block = 1
    n_blocks = B // batch_block

    # Derived, layout-friendly weight arrays (all plumbing stays in the wrapper).
    w1t = params["w1"].T                                  # (IN, MID)
    b1r = params["b1"].reshape(1, -1)                     # (1, MID)
    w2 = params["w2"]                                     # (S, MID)
    b2c = params["b2"].reshape(-1, 1)                     # (S, 1)
    rw = params["rw"]                                     # (F, IN)
    gamma = params["gamma"].reshape(-1, 1)                # (F, 1)
    beta = params["beta"].reshape(-1, 1)                  # (F, 1)
    idx_in = jnp.arange(C)
    smap = (idx_in[None, :] // Fc == jnp.arange(S)[:, None]).astype(jnp.float32)  # (S, IN)
    idx_f = jnp.arange(Fc)
    gmap = (idx_f[None, :] // gF == jnp.arange(G)[:, None]).astype(jnp.float32)   # (G, F)
    P = gmap.T @ gmap                                     # (F, F) group indicator

    weights = [w1t, b1r, w2, b2c, rw, gamma, beta, smap, P]

    def full_spec(a):
        nd = a.ndim
        return pl.BlockSpec(a.shape, lambda i, _nd=nd: (0,) * _nd)

    in_specs = [pl.BlockSpec((batch_block, C, HWp), lambda i: (i, 0, 0))]
    in_specs += [full_spec(a) for a in weights]
    out_specs = pl.BlockSpec((batch_block, Fc, HWp), lambda i: (i, 0, 0))

    kernel = functools.partial(task_spliter_kernel, hw_true=HW, group_size=gF)

    flops = 2 * B * Fc * C * HW + 2 * B * 2 * Fc * Fc
    transcendentals = B * Fc * HW + B * (S + Fc)
    bytes_accessed = (B * C * HWp * 2 + B * Fc * HWp * 4
                      + sum(int(a.size) * a.dtype.itemsize for a in weights))
    ce = pl.CostEstimate(flops=flops, transcendentals=transcendentals,
                         bytes_accessed=bytes_accessed)

    out = pl.pallas_call(
        kernel,
        out_shape=jax.ShapeDtypeStruct((B, Fc, HWp), jnp.float32),
        grid_spec=pltpu.PrefetchScalarGridSpec(
            num_scalar_prefetch=0,
            grid=(n_blocks,),
            in_specs=in_specs,
            out_specs=out_specs,
        ),
        compiler_params=pltpu.CompilerParams(dimension_semantics=("parallel",)),
        cost_estimate=ce,
    )(feat_flat, *weights)

    if HWp != HW:
        out = out[..., :HW]
    return out.reshape(B, Fc, H, W)


def reference(feat, p, Fc, S, G):
    """Pure-JAX (f32) re-implementation of TaskSpliter.forward for verification."""
    B, C, H, W = feat.shape
    avg = jnp.mean(feat, axis=(2, 3))                                 # (B, IN)
    h1 = jnp.maximum(avg @ p["w1"].T + p["b1"], 0.0)                  # (B, MID)
    w2 = jax.nn.sigmoid(h1 @ p["w2"].T + p["b2"])                     # (B, S)
    cw = w2.reshape(B, 1, S, 1) * p["rw"].reshape(1, Fc, S, Fc)
    cw = cw.reshape(B, Fc, C)
    y = jnp.einsum("bfi,bix->bfx", cw, feat.reshape(B, C, H * W))
    gF = Fc // G
    yg = y.reshape(B, G, gF * H * W)
    mean = yg.mean(-1, keepdims=True)
    var = yg.var(-1, keepdims=True)
    yn = (yg - mean) / jnp.sqrt(var + 1e-5)
    yn = yn.reshape(B, Fc, H * W)
    yn = yn * p["gamma"][None, :, None] + p["beta"][None, :, None]
    out = yn * jax.nn.sigmoid(yn)
    return out.reshape(B, Fc, H, W)


if __name__ == "__main__":
    # feat_channels=32, stacked_convs=4 -> in_channels=128, la_down_rate=8 -> MID=16
    B, Fc, S, H, W = 2, 32, 4, 16, 16
    IN = Fc * S            # 128
    MID = IN // 8          # 16
    G = 16                 # GroupNorm(16, feat_channels)

    key = jax.random.PRNGKey(0)
    ks = jax.random.split(key, 6)

    params = dict(
        # la_conv1: normal(std=0.001) weight, small uniform bias
        w1=0.001 * jax.random.normal(ks[0], (MID, IN), jnp.float32),
        b1=jax.random.uniform(ks[1], (MID,), jnp.float32, -1.0, 1.0) / jnp.sqrt(IN),
        # la_conv2: normal(std=0.001) weight, zero bias
        w2=0.001 * jax.random.normal(ks[2], (S, MID), jnp.float32),
        b2=jnp.zeros((S,), jnp.float32),
        # reduction_conv.conv: normal(std=0.01), no bias
        rw=0.01 * jax.random.normal(ks[3], (Fc, IN), jnp.float32),
        # GroupNorm affine params (PyTorch default init)
        gamma=jnp.ones((Fc,), jnp.float32),
        beta=jnp.zeros((Fc,), jnp.float32),
    )

    feat = jax.random.normal(ks[4], (B, IN, H, W), jnp.float32)

    out = task_spliter_forward(feat, params)
    jax.block_until_ready(out)

    ref = reference(feat, params, Fc, S, G)
    assert out.shape == (B, Fc, H, W)
    max_err = float(jnp.max(jnp.abs(out - ref)))
    assert jnp.allclose(out, ref, atol=5e-2, rtol=5e-2), max_err

    print("KERNEL_OK")
</pallas_src>

<mosaic_0001>
module attributes {stable_mosaic.version = 11 : i64} {
  func.func @task_spliter_kernel(%arg0: i32, %arg1: memref<1x128x256xbf16, #tpu.memory_space<vmem>>, %arg2: memref<128x16xf32, #tpu.memory_space<vmem>>, %arg3: memref<1x16xf32, #tpu.memory_space<vmem>>, %arg4: memref<4x16xf32, #tpu.memory_space<vmem>>, %arg5: memref<4x1xf32, #tpu.memory_space<vmem>>, %arg6: memref<32x128xf32, #tpu.memory_space<vmem>>, %arg7: memref<32x1xf32, #tpu.memory_space<vmem>>, %arg8: memref<32x1xf32, #tpu.memory_space<vmem>>, %arg9: memref<4x128xf32, #tpu.memory_space<vmem>>, %arg10: memref<32x32xf32, #tpu.memory_space<vmem>>, %arg11: memref<1x32x256xf32, #tpu.memory_space<vmem>>) attributes {dimension_semantics = [#tpu.dimension_semantics<parallel>], iteration_bounds = array<i64: 2>, scalar_prefetch = 0 : i64, scratch_operands = 0 : i64, tpu.core_type = #tpu.core_type<tc>, window_params = [{transform_indices = @transform_0, window_bounds = array<i64: 1, 128, 256>}, {pipeline_mode = #tpu.pipeline_mode<synchronous>, transform_indices = @transform_1, window_bounds = array<i64: 128, 16>}, {pipeline_mode = #tpu.pipeline_mode<synchronous>, transform_indices = @transform_2, window_bounds = array<i64: 1, 16>}, {pipeline_mode = #tpu.pipeline_mode<synchronous>, transform_indices = @transform_3, window_bounds = array<i64: 4, 16>}, {pipeline_mode = #tpu.pipeline_mode<synchronous>, transform_indices = @transform_4, window_bounds = array<i64: 4, 1>}, {pipeline_mode = #tpu.pipeline_mode<synchronous>, transform_indices = @transform_5, window_bounds = array<i64: 32, 128>}, {pipeline_mode = #tpu.pipeline_mode<synchronous>, transform_indices = @transform_6, window_bounds = array<i64: 32, 1>}, {pipeline_mode = #tpu.pipeline_mode<synchronous>, transform_indices = @transform_7, window_bounds = array<i64: 32, 1>}, {pipeline_mode = #tpu.pipeline_mode<synchronous>, transform_indices = @transform_8, window_bounds = array<i64: 4, 128>}, {pipeline_mode = #tpu.pipeline_mode<synchronous>, transform_indices = @transform_9, window_bounds = array<i64: 32, 32>}, {transform_indices = @transform_10, window_bounds = array<i64: 1, 32, 256>}]} {
    %c0 = arith.constant 0 : index
    %c0_0 = arith.constant 0 : index
    %c0_1 = arith.constant 0 : index
    %0 = vector.load %arg1[%c0, %c0_0, %c0_1] : memref<1x128x256xbf16, #tpu.memory_space<vmem>>, vector<1x128x256xbf16>
    %1 = arith.extf %0 : vector<1x128x256xbf16> to vector<1x128x256xf32>
    %cst = arith.constant dense<0.000000e+00> : vector<1x128xf32>
    %2 = vector.multi_reduction <add>, %1, %cst [2] : vector<1x128x256xf32> to vector<1x128xf32>
    %3 = vector.shape_cast %2 : vector<1x128xf32> to vector<1x128x1xf32>
    %cst_2 = arith.constant 3.906250e-03 : f32
    %4 = vector.broadcast %cst_2 : f32 to vector<1x128x1xf32>
    %5 = arith.mulf %3, %4 : vector<1x128x1xf32>
    %c0_3 = arith.constant 0 : index
    %c0_4 = arith.constant 0 : index
    %6 = vector.load %arg2[%c0_3, %c0_4] : memref<128x16xf32, #tpu.memory_space<vmem>>, vector<128x16xf32>
    %7 = vector.shape_cast %6 : vector<128x16xf32> to vector<1x128x16xf32>
    %8 = vector.broadcast %5 : vector<1x128x1xf32> to vector<1x128x16xf32>
    %9 = arith.mulf %8, %7 : vector<1x128x16xf32>
    %cst_5 = arith.constant dense<0.000000e+00> : vector<1x16xf32>
    %10 = vector.multi_reduction <add>, %9, %cst_5 [1] : vector<1x128x16xf32> to vector<1x16xf32>
    %11 = vector.shape_cast %10 : vector<1x16xf32> to vector<1x1x16xf32>
    %c0_6 = arith.constant 0 : index
    %c0_7 = arith.constant 0 : index
    %12 = vector.load %arg3[%c0_6, %c0_7] : memref<1x16xf32, #tpu.memory_space<vmem>>, vector<1x16xf32>
    %13 = vector.shape_cast %12 : vector<1x16xf32> to vector<1x1x16xf32>
    %14 = arith.addf %11, %13 : vector<1x1x16xf32>
    %cst_8 = arith.constant 0.000000e+00 : f32
    %15 = vector.broadcast %cst_8 : f32 to vector<1x1x16xf32>
    %16 = arith.maximumf %14, %15 : vector<1x1x16xf32>
    %c0_9 = arith.constant 0 : index
    %c0_10 = arith.constant 0 : index
    %17 = vector.load %arg4[%c0_9, %c0_10] : memref<4x16xf32, #tpu.memory_space<vmem>>, vector<4x16xf32>
    %18 = vector.shape_cast %17 : vector<4x16xf32> to vector<1x4x16xf32>
    %19 = vector.broadcast %16 : vector<1x1x16xf32> to vector<1x4x16xf32>
    %20 = arith.mulf %18, %19 : vector<1x4x16xf32>
    %cst_11 = arith.constant dense<0.000000e+00> : vector<1x4xf32>
    %21 = vector.multi_reduction <add>, %20, %cst_11 [2] : vector<1x4x16xf32> to vector<1x4xf32>
    %22 = vector.shape_cast %21 : vector<1x4xf32> to vector<1x4x1xf32>
    %c0_12 = arith.constant 0 : index
    %c0_13 = arith.constant 0 : index
    %23 = vector.load %arg5[%c0_12, %c0_13] : memref<4x1xf32, #tpu.memory_space<vmem>>, vector<4x1xf32>
    %24 = vector.shape_cast %23 : vector<4x1xf32> to vector<1x4x1xf32>
    %25 = arith.addf %22, %24 : vector<1x4x1xf32>
    %26 = arith.negf %25 : vector<1x4x1xf32>
    %27 = math.exp %26 : vector<1x4x1xf32>
    %cst_14 = arith.constant 1.000000e+00 : f32
    %28 = vector.broadcast %cst_14 : f32 to vector<1x4x1xf32>
    %29 = arith.addf %28, %27 : vector<1x4x1xf32>
    %30 = arith.divf %28, %29 : vector<1x4x1xf32>
    %c0_15 = arith.constant 0 : index
    %c0_16 = arith.constant 0 : index
    %31 = vector.load %arg9[%c0_15, %c0_16] : memref<4x128xf32, #tpu.memory_space<vmem>>, vector<4x128xf32>
    %32 = vector.shape_cast %31 : vector<4x128xf32> to vector<1x4x128xf32>
    %33 = vector.broadcast %30 : vector<1x4x1xf32> to vector<1x4x128xf32>
    %34 = arith.mulf %33, %32 : vector<1x4x128xf32>
    %cst_17 = arith.constant dense<0.000000e+00> : vector<1x128xf32>
    %35 = vector.multi_reduction <add>, %34, %cst_17 [1] : vector<1x4x128xf32> to vector<1x128xf32>
    %36 = vector.shape_cast %35 : vector<1x128xf32> to vector<1x1x128xf32>
    %c0_18 = arith.constant 0 : index
    %c0_19 = arith.constant 0 : index
    %37 = vector.load %arg6[%c0_18, %c0_19] : memref<32x128xf32, #tpu.memory_space<vmem>>, vector<32x128xf32>
    %38 = vector.shape_cast %37 : vector<32x128xf32> to vector<1x32x128xf32>
    %39 = vector.broadcast %36 : vector<1x1x128xf32> to vector<1x32x128xf32>
    %40 = arith.mulf %38, %39 : vector<1x32x128xf32>
    %41 = arith.truncf %40 : vector<1x32x128xf32> to vector<1x32x128xbf16>
    "tpu.trace_start"() <{level = 10 : i32, message = "bfi,bix->bfx"}> : () -> ()
    %cst_20 = arith.constant dense<0.000000e+00> : vector<1x32x256xf32>
    %42 = tpu.matmul %41, %0, %cst_20 {dimension_numbers = #tpu.dot_dimension_numbers<[2], [1], [1], [2], [0, 0, 0, 1, 1, 2], [0], [0]>} : vector<1x32x128xbf16>, vector<1x128x256xbf16>, vector<1x32x256xf32> -> vector<1x32x256xf32>
    "tpu.trace_stop"() : () -> ()
    %cst_21 = arith.constant dense<0.000000e+00> : vector<1x32xf32>
    %43 = vector.multi_reduction <add>, %42, %cst_21 [2] : vector<1x32x256xf32> to vector<1x32xf32>
    %44 = vector.shape_cast %43 : vector<1x32xf32> to vector<1x32x1xf32>
    %45 = arith.mulf %42, %42 : vector<1x32x256xf32>
    %cst_22 = arith.constant dense<0.000000e+00> : vector<1x32xf32>
    %46 = vector.multi_reduction <add>, %45, %cst_22 [2] : vector<1x32x256xf32> to vector<1x32xf32>
    %47 = vector.shape_cast %46 : vector<1x32xf32> to vector<1x32x1xf32>
    %c0_23 = arith.constant 0 : index
    %c0_24 = arith.constant 0 : index
    %48 = vector.load %arg10[%c0_23, %c0_24] : memref<32x32xf32, #tpu.memory_space<vmem>>, vector<32x32xf32>
    %49 = vector.shape_cast %48 : vector<32x32xf32> to vector<1x32x32xf32>
    "tpu.trace_start"() <{level = 10 : i32, message = "bfg,bgo->bfo"}> : () -> ()
    %cst_25 = arith.constant dense<0.000000e+00> : vector<1x32x1xf32>
    %50 = tpu.matmul %49, %44, %cst_25 {dimension_numbers = #tpu.dot_dimension_numbers<[2], [1], [1], [2], [0, 0, 0, 1, 1, 2], [0], [0]>} : vector<1x32x32xf32>, vector<1x32x1xf32>, vector<1x32x1xf32> -> vector<1x32x1xf32>
    %cst_26 = arith.constant dense<0.000000e+00> : vector<1x32x1xf32>
    %51 = tpu.matmul %49, %47, %cst_26 {dimension_numbers = #tpu.dot_dimension_numbers<[2], [1], [1], [2], [0, 0, 0, 1, 1, 2], [0], [0]>} : vector<1x32x32xf32>, vector<1x32x1xf32>, vector<1x32x1xf32> -> vector<1x32x1xf32>
    "tpu.trace_stop"() : () -> ()
    %cst_27 = arith.constant 0.001953125 : f32
    %52 = vector.broadcast %cst_27 : f32 to vector<1x32x1xf32>
    %53 = arith.mulf %50, %52 : vector<1x32x1xf32>
    %cst_28 = arith.constant 0.001953125 : f32
    %54 = vector.broadcast %cst_28 : f32 to vector<1x32x1xf32>
    %55 = arith.mulf %51, %54 : vector<1x32x1xf32>
    %56 = arith.mulf %53, %53 : vector<1x32x1xf32>
    %57 = arith.subf %55, %56 : vector<1x32x1xf32>
    %cst_29 = arith.constant 0.000000e+00 : f32
    %58 = vector.broadcast %cst_29 : f32 to vector<1x32x1xf32>
    %59 = arith.maximumf %57, %58 : vector<1x32x1xf32>
    %cst_30 = arith.constant 9.99999974E-6 : f32
    %60 = vector.broadcast %cst_30 : f32 to vector<1x32x1xf32>
    %61 = arith.addf %59, %60 : vector<1x32x1xf32>
    %62 = math.rsqrt %61 : vector<1x32x1xf32>
    %63 = vector.broadcast %53 : vector<1x32x1xf32> to vector<1x32x256xf32>
    %64 = arith.subf %42, %63 : vector<1x32x256xf32>
    %c0_31 = arith.constant 0 : index
    %c0_32 = arith.constant 0 : index
    %65 = vector.load %arg7[%c0_31, %c0_32] : memref<32x1xf32, #tpu.memory_space<vmem>>, vector<32x1xf32>
    %66 = vector.shape_cast %65 : vector<32x1xf32> to vector<1x32x1xf32>
    %67 = arith.mulf %62, %66 : vector<1x32x1xf32>
    %68 = vector.broadcast %67 : vector<1x32x1xf32> to vector<1x32x256xf32>
    %69 = arith.mulf %64, %68 : vector<1x32x256xf32>
    %c0_33 = arith.constant 0 : index
    %c0_34 = arith.constant 0 : index
    %70 = vector.load %arg8[%c0_33, %c0_34] : memref<32x1xf32, #tpu.memory_space<vmem>>, vector<32x1xf32>
    %71 = vector.shape_cast %70 : vector<32x1xf32> to vector<1x32x1xf32>
    %72 = vector.broadcast %71 : vector<1x32x1xf32> to vector<1x32x256xf32>
    %73 = arith.addf %69, %72 : vector<1x32x256xf32>
    %74 = arith.negf %73 : vector<1x32x256xf32>
    %75 = math.exp %74 : vector<1x32x256xf32>
    %cst_35 = arith.constant 1.000000e+00 : f32
    %76 = vector.broadcast %cst_35 : f32 to vector<1x32x256xf32>
    %77 = arith.addf %76, %75 : vector<1x32x256xf32>
    %78 = arith.divf %76, %77 : vector<1x32x256xf32>
    %79 = arith.mulf %73, %78 : vector<1x32x256xf32>
    %c0_36 = arith.constant 0 : index
    %c0_37 = arith.constant 0 : index
    %c0_38 = arith.constant 0 : index
    %80 = vector.load %arg11[%c0_36, %c0_37, %c0_38] : memref<1x32x256xf32, #tpu.memory_space<vmem>>, vector<1x32x256xf32>
    tpu.vector_store %arg11[%c0_36, %c0_37, %c0_38], %79 {strides = array<i32>} : memref<1x32x256xf32, #tpu.memory_space<vmem>>, vector<1x32x256xf32>,
    return
  }
  func.func @transform_0(%arg0: i32) -> (i32, i32, i32) {
    %c0_i32 = arith.constant 0 : i32
    %c0_i32_0 = arith.constant 0 : i32
    %c0_i32_1 = arith.constant 0 : i32
    return %arg0, %c0_i32, %c0_i32_0 : i32, i32, i32
  }
  func.func @transform_1(%arg0: i32) -> (i32, i32) {
    %c0_i32 = arith.constant 0 : i32
    %c0_i32_0 = arith.constant 0 : i32
    %c0_i32_1 = arith.constant 0 : i32
    return %c0_i32, %c0_i32_0 : i32, i32
  }
  func.func @transform_2(%arg0: i32) -> (i32, i32) {
    %c0_i32 = arith.constant 0 : i32
    %c0_i32_0 = arith.constant 0 : i32
    %c0_i32_1 = arith.constant 0 : i32
    return %c0_i32, %c0_i32_0 : i32, i32
  }
  func.func @transform_3(%arg0: i32) -> (i32, i32) {
    %c0_i32 = arith.constant 0 : i32
    %c0_i32_0 = arith.constant 0 : i32
    %c0_i32_1 = arith.constant 0 : i32
    return %c0_i32, %c0_i32_0 : i32, i32
  }
  func.func @transform_4(%arg0: i32) -> (i32, i32) {
    %c0_i32 = arith.constant 0 : i32
    %c0_i32_0 = arith.constant 0 : i32
    %c0_i32_1 = arith.constant 0 : i32
    return %c0_i32, %c0_i32_0 : i32, i32
  }
  func.func @transform_5(%arg0: i32) -> (i32, i32) {
    %c0_i32 = arith.constant 0 : i32
    %c0_i32_0 = arith.constant 0 : i32
    %c0_i32_1 = arith.constant 0 : i32
    return %c0_i32, %c0_i32_0 : i32, i32
  }
  func.func @transform_6(%arg0: i32) -> (i32, i32) {
    %c0_i32 = arith.constant 0 : i32
    %c0_i32_0 = arith.constant 0 : i32
    %c0_i32_1 = arith.constant 0 : i32
    return %c0_i32, %c0_i32_0 : i32, i32
  }
  func.func @transform_7(%arg0: i32) -> (i32, i32) {
    %c0_i32 = arith.constant 0 : i32
    %c0_i32_0 = arith.constant 0 : i32
    %c0_i32_1 = arith.constant 0 : i32
    return %c0_i32, %c0_i32_0 : i32, i32
  }
  func.func @transform_8(%arg0: i32) -> (i32, i32) {
    %c0_i32 = arith.constant 0 : i32
    %c0_i32_0 = arith.constant 0 : i32
    %c0_i32_1 = arith.constant 0 : i32
    return %c0_i32, %c0_i32_0 : i32, i32
  }
  func.func @transform_9(%arg0: i32) -> (i32, i32) {
    %c0_i32 = arith.constant 0 : i32
    %c0_i32_0 = arith.constant 0 : i32
    %c0_i32_1 = arith.constant 0 : i32
    return %c0_i32, %c0_i32_0 : i32, i32
  }
  func.func @transform_10(%arg0: i32) -> (i32, i32, i32) {
    %c0_i32 = arith.constant 0 : i32
    %c0_i32_0 = arith.constant 0 : i32
    %c0_i32_1 = arith.constant 0 : i32
    return %arg0, %c0_i32, %c0_i32_0 : i32, i32, i32
  }
}

</mosaic_0001>

<llo_original>
// kernel: tpu_custom_call.1
$region0: #{tpu_custom_call.1}
  #allocation0 [shape = 'u32[]', space=smem, size = 0x4, offset = 0x4, fixed_abs, tag = 'smem constant byte address 0x4 - core index']
  #allocation1 [shape = 'u32[144,128]{1,0:T(1,128)}', space=vmem, size = 0x12000, scoped, tag = 'internal scratch']
  %s0 = inlined_call_operand.hbm [shape: bf16[2,128,256], index: 0, kind: input, shape index: {}]
  %s1 = inlined_call_operand.vmem [shape: f32[128,16], index: 1, kind: input, shape index: {}]
  %s2 = inlined_call_operand.vmem [shape: f32[1,16], index: 2, kind: input, shape index: {}]
  %s3 = inlined_call_operand.vmem [shape: f32[4,16], index: 3, kind: input, shape index: {}]
  %s4 = inlined_call_operand.vmem [shape: f32[4,1], index: 4, kind: input, shape index: {}]
  %s5 = inlined_call_operand.vmem [shape: f32[32,128], index: 5, kind: input, shape index: {}]
  %s6 = inlined_call_operand.vmem [shape: f32[32,1], index: 6, kind: input, shape index: {}]
  %s7 = inlined_call_operand.vmem [shape: f32[32,1], index: 7, kind: input, shape index: {}]
  %s8 = inlined_call_operand.vmem [shape: f32[4,128], index: 8, kind: input, shape index: {}]
  %s9 = inlined_call_operand.vmem [shape: f32[32,32], index: 9, kind: input, shape index: {}]
  %s10 = inlined_call_operand.hbm [shape: f32[2,32,256], index: 10, kind: output, shape index: {}]
  %s11 = sld [smem:[#allocation0]]
  $region77: #{tpu_custom_call.1} parent=0
    _
  %s13 = ssub.s32 1, %s11
  %s14 = scalar_select 0, %s13, %s11
  $region1: #{tpu_custom_call.1} parent=0
    #allocation2 [shape = 'u8[131072]{0}', space=vmem, size = 0x20000, scoped, tag = 'input window, operand 0']
    #allocation3 [shape = 's32[2]{0}', space=sflag, size = 0x8, scoped, tag = 'scoped memory for tpu_custom_call.1']
    #allocation4 [shape = 's32[2]{0}', space=sflag, size = 0x8, scoped, tag = 'scoped memory for tpu_custom_call.1']
    #allocation5 [shape = 'u8[65536]{0}', space=vmem, size = 0x10000, scoped, tag = 'output window, operand 0']
    %15 = vsyncpa [#allocation3], 0
    %s16 = scalar_lea.sflag [#allocation3], 1
    %17 = vsyncpa %s16, 0
    %18 = vsyncpa [#allocation4], 0
    %s19 = scalar_lea.sflag [#allocation4], 1
    %20 = vsyncpa %s19, 0
    loop: start=0, step=1, limit=4
    $region2: #{tpu_custom_call.1} parent=1 // loop_pre_header
      _
    $region3: #{tpu_custom_call.1} parent=1 // loop_header
      %s22 = sphi 0, %s26
      %p23 = scmp.ge.s32.totalorder %s22, 4
      %s32 = sphi 0, %s34
      %s35 = sphi 0, %s32
      %s36 = sphi 0, %s35
      %s52 = sphi 0, %s36
      %s56 = sphi 0, %s56
      %s58 = sphi 0, %s56
      %s59 = sphi 0, %s58
      %s73 = sphi 0, %s59
      %s77 = sphi 0, %s77
      %s79 = sphi 0, %s77
      %s80 = sphi 0, %s79
      %s94 = sphi 0, %s80
      %s98 = sphi 0, %s98
      %s100 = sphi 0, %s98
      %s101 = sphi 0, %s100
      %s115 = sphi 0, %s101
      %s119 = sphi 0, %s119
      %s121 = sphi 0, %s119
      %s122 = sphi 0, %s121
      %s136 = sphi 0, %s122
      %s140 = sphi 0, %s140
      %s142 = sphi 0, %s140
      %s143 = sphi 0, %s142
      %s157 = sphi 0, %s143
      %s161 = sphi 0, %s161
      %s163 = sphi 0, %s161
      %s164 = sphi 0, %s163
      %s178 = sphi 0, %s164
      %s182 = sphi 0, %s182
      %s184 = sphi 0, %s182
      %s185 = sphi 0, %s184
      %s199 = sphi 0, %s185
      %s203 = sphi 0, %s203
      %s205 = sphi 0, %s203
      %s206 = sphi 0, %s205
      %s220 = sphi 0, %s206
      %s224 = sphi 0, %s224
      %s226 = sphi 0, %s224
      %s227 = sphi 0, %s226
      %s241 = sphi 0, %s227
      %s247 = sphi 0, %s249
      %s250 = sphi 0, %s247
      %s251 = sphi 0, %s250
      %s267 = sphi 0, %s251
    $region4: #{tpu_custom_call.1} parent=1 // loop_header_branch
      %25 = sbr.rel (%p23) target = $region8
    $region5: #{tpu_custom_call.1} parent=1 // loop_body
      %s27 = ssub.s32 %s22, 1
      %s28 = ssub.s32 %s22, 2
      %s29 = sadd.s32 %s22, 1
      %s30 = ssub.s32 %s22, %s29
      %p31 = scmp.eq.s32.totalorder %s30, 0
      %s33 = sadd.s32 %s32, 1
      %s34 = scalar_select %p31, %s32, %s33
      %p37 = pneg %p31
      %p38 = scmp.eq.s32.totalorder %s22, 1
      %p39 = por %p37, %p38
      %p40 = scmp.ne.s32.totalorder %s32, %s35
      %p41 = scmp.eq.s32.totalorder %s22, 0
      %p42 = por %p40, %p41
      %p43 = scmp.ne.s32.totalorder %s32, %s35
      %p44 = scmp.eq.s32.totalorder %s27, 1
      %p45 = por %p43, %p44
      %p46 = scmp.ne.s32.totalorder %s35, %s36
      %p47 = scmp.eq.s32.totalorder %s27, 0
      %p48 = por %p46, %p47
      %p49 = scmp.ne.s32.totalorder %s35, %s36
      %p50 = scmp.eq.s32.totalorder %s28, 1
      %p51 = por %p49, %p50
      %p53 = scmp.ne.s32.totalorder %s36, %s52
      %p54 = scmp.eq.s32.totalorder %s28, 0
      %p55 = por %p53, %p54
      %s57 = sadd.s32 %s56, 1
      %p60 = scmp.eq.s32.totalorder %s22, 1
      %p61 = scmp.ne.s32.totalorder %s56, %s58
      %p62 = scmp.eq.s32.totalorder %s22, 0
      %p63 = por %p61, %p62
      %p64 = scmp.ne.s32.totalorder %s56, %s58
      %p65 = scmp.eq.s32.totalorder %s27, 1
      %p66 = por %p64, %p65
      %p67 = scmp.ne.s32.totalorder %s58, %s59
      %p68 = scmp.eq.s32.totalorder %s27, 0
      %p69 = por %p67, %p68
      %p70 = scmp.ne.s32.totalorder %s58, %s59
      %p71 = scmp.eq.s32.totalorder %s28, 1
      %p72 = por %p70, %p71
      %p74 = scmp.ne.s32.totalorder %s59, %s73
      %p75 = scmp.eq.s32.totalorder %s28, 0
      %p76 = por %p74, %p75
      %s78 = sadd.s32 %s77, 1
      %p81 = scmp.eq.s32.totalorder %s22, 1
      %p82 = scmp.ne.s32.totalorder %s77, %s79
      %p83 = scmp.eq.s32.totalorder %s22, 0
      %p84 = por %p82, %p83
      %p85 = scmp.ne.s32.totalorder %s77, %s79
      %p86 = scmp.eq.s32.totalorder %s27, 1
      %p87 = por %p85, %p86
      %p88 = scmp.ne.s32.totalorder %s79, %s80
      %p89 = scmp.eq.s32.totalorder %s27, 0
      %p90 = por %p88, %p89
      %p91 = scmp.ne.s32.totalorder %s79, %s80
      %p92 = scmp.eq.s32.totalorder %s28, 1
      %p93 = por %p91, %p92
      %p95 = scmp.ne.s32.totalorder %s80, %s94
      %p96 = scmp.eq.s32.totalorder %s28, 0
      %p97 = por %p95, %p96
      %s99 = sadd.s32 %s98, 1
      %p102 = scmp.eq.s32.totalorder %s22, 1
      %p103 = scmp.ne.s32.totalorder %s98, %s100
      %p104 = scmp.eq.s32.totalorder %s22, 0
      %p105 = por %p103, %p104
      %p106 = scmp.ne.s32.totalorder %s98, %s100
      %p107 = scmp.eq.s32.totalorder %s27, 1
      %p108 = por %p106, %p107
      %p109 = scmp.ne.s32.totalorder %s100, %s101
      %p110 = scmp.eq.s32.totalorder %s27, 0
      %p111 = por %p109, %p110
      %p112 = scmp.ne.s32.totalorder %s100, %s101
      %p113 = scmp.eq.s32.totalorder %s28, 1
      %p114 = por %p112, %p113
      %p116 = scmp.ne.s32.totalorder %s101, %s115
      %p117 = scmp.eq.s32.totalorder %s28, 0
      %p118 = por %p116, %p117
      %s120 = sadd.s32 %s119, 1
      %p123 = scmp.eq.s32.totalorder %s22, 1
      %p124 = scmp.ne.s32.totalorder %s119, %s121
      %p125 = scmp.eq.s32.totalorder %s22, 0
      %p126 = por %p124, %p125
      %p127 = scmp.ne.s32.totalorder %s119, %s121
      %p128 = scmp.eq.s32.totalorder %s27, 1
      %p129 = por %p127, %p128
      %p130 = scmp.ne.s32.totalorder %s121, %s122
      %p131 = scmp.eq.s32.totalorder %s27, 0
      %p132 = por %p130, %p131
      %p133 = scmp.ne.s32.totalorder %s121, %s122
      %p134 = scmp.eq.s32.totalorder %s28, 1
      %p135 = por %p133, %p134
      %p137 = scmp.ne.s32.totalorder %s122, %s136
      %p138 = scmp.eq.s32.totalorder %s28, 0
      %p139 = por %p137, %p138
      %s141 = sadd.s32 %s140, 1
      %p144 = scmp.eq.s32.totalorder %s22, 1
      %p145 = scmp.ne.s32.totalorder %s140, %s142
      %p146 = scmp.eq.s32.totalorder %s22, 0
      %p147 = por %p145, %p146
      %p148 = scmp.ne.s32.totalorder %s140, %s142
      %p149 = scmp.eq.s32.totalorder %s27, 1
      %p150 = por %p148, %p149
      %p151 = scmp.ne.s32.totalorder %s142, %s143
      %p152 = scmp.eq.s32.totalorder %s27, 0
      %p153 = por %p151, %p152
      %p154 = scmp.ne.s32.totalorder %s142, %s143
      %p155 = scmp.eq.s32.totalorder %s28, 1
      %p156 = por %p154, %p155
      %p158 = scmp.ne.s32.totalorder %s143, %s157
      %p159 = scmp.eq.s32.totalorder %s28, 0
      %p160 = por %p158, %p159
      %s162 = sadd.s32 %s161, 1
      %p165 = scmp.eq.s32.totalorder %s22, 1
      %p166 = scmp.ne.s32.totalorder %s161, %s163
      %p167 = scmp.eq.s32.totalorder %s22, 0
      %p168 = por %p166, %p167
      %p169 = scmp.ne.s32.totalorder %s161, %s163
      %p170 = scmp.eq.s32.totalorder %s27, 1
      %p171 = por %p169, %p170
      %p172 = scmp.ne.s32.totalorder %s163, %s164
      %p173 = scmp.eq.s32.totalorder %s27, 0
      %p174 = por %p172, %p173
      %p175 = scmp.ne.s32.totalorder %s163, %s164
      %p176 = scmp.eq.s32.totalorder %s28, 1
      %p177 = por %p175, %p176
      %p179 = scmp.ne.s32.totalorder %s164, %s178
      %p180 = scmp.eq.s32.totalorder %s28, 0
      %p181 = por %p179, %p180
      %s183 = sadd.s32 %s182, 1
      %p186 = scmp.eq.s32.totalorder %s22, 1
      %p187 = scmp.ne.s32.totalorder %s182, %s184
      %p188 = scmp.eq.s32.totalorder %s22, 0
      %p189 = por %p187, %p188
      %p190 = scmp.ne.s32.totalorder %s182, %s184
      %p191 = scmp.eq.s32.totalorder %s27, 1
      %p192 = por %p190, %p191
      %p193 = scmp.ne.s32.totalorder %s184, %s185
      %p194 = scmp.eq.s32.totalorder %s27, 0
      %p195 = por %p193, %p194
      %p196 = scmp.ne.s32.totalorder %s184, %s185
      %p197 = scmp.eq.s32.totalorder %s28, 1
      %p198 = por %p196, %p197
      %p200 = scmp.ne.s32.totalorder %s185, %s199
      %p201 = scmp.eq.s32.totalorder %s28, 0
      %p202 = por %p200, %p201
      %s204 = sadd.s32 %s203, 1
      %p207 = scmp.eq.s32.totalorder %s22, 1
      %p208 = scmp.ne.s32.totalorder %s203, %s205
      %p209 = scmp.eq.s32.totalorder %s22, 0
      %p210 = por %p208, %p209
      %p211 = scmp.ne.s32.totalorder %s203, %s205
      %p212 = scmp.eq.s32.totalorder %s27, 1
      %p213 = por %p211, %p212
      %p214 = scmp.ne.s32.totalorder %s205, %s206
      %p215 = scmp.eq.s32.totalorder %s27, 0
      %p216 = por %p214, %p215
      %p217 = scmp.ne.s32.totalorder %s205, %s206
      %p218 = scmp.eq.s32.totalorder %s28, 1
      %p219 = por %p217, %p218
      %p221 = scmp.ne.s32.totalorder %s206, %s220
      %p222 = scmp.eq.s32.totalorder %s28, 0
      %p223 = por %p221, %p222
      %s225 = sadd.s32 %s224, 1
      %p228 = scmp.eq.s32.totalorder %s22, 1
      %p229 = scmp.ne.s32.totalorder %s224, %s226
      %p230 = scmp.eq.s32.totalorder %s22, 0
      %p231 = por %p229, %p230
      %p232 = scmp.ne.s32.totalorder %s224, %s226
      %p233 = scmp.eq.s32.totalorder %s27, 1
      %p234 = por %p232, %p233
      %p235 = scmp.ne.s32.totalorder %s226, %s227
      %p236 = scmp.eq.s32.totalorder %s27, 0
      %p237 = por %p235, %p236
      %p238 = scmp.ne.s32.totalorder %s226, %s227
      %p239 = scmp.eq.s32.totalorder %s28, 1
      %p240 = por %p238, %p239
      %p242 = scmp.ne.s32.totalorder %s227, %s241
      %p243 = scmp.eq.s32.totalorder %s28, 0
      %p244 = por %p242, %p243
      %s245 = ssub.s32 %s22, %s29
      %p246 = scmp.eq.s32.totalorder %s245, 0
      %s248 = sadd.s32 %s247, 1
      %s249 = scalar_select %p246, %s247, %s248
      %p252 = pneg %p246
      %p253 = scmp.eq.s32.totalorder %s22, 1
      %p254 = por %p252, %p253
      %p255 = scmp.ne.s32.totalorder %s247, %s250
      %p256 = scmp.eq.s32.totalorder %s22, 0
      %p257 = por %p255, %p256
      %p258 = scmp.ne.s32.totalorder %s247, %s250
      %p259 = scmp.eq.s32.totalorder %s27, 1
      %p260 = por %p258, %p259
      %p261 = scmp.ne.s32.totalorder %s250, %s251
      %p262 = scmp.eq.s32.totalorder %s27, 0
      %p263 = por %p261, %p262
      %p264 = scmp.ne.s32.totalorder %s250, %s251
      %p265 = scmp.eq.s32.totalorder %s28, 1
      %p266 = por %p264, %p265
      %p268 = scmp.ne.s32.totalorder %s251, %s267
      %p269 = scmp.eq.s32.totalorder %s28, 0
      %p270 = por %p268, %p269
      %p271 = scmp.le.s32.totalorder 1, %s22
      %p272 = scmp.lt.s32.totalorder %s22, 3
      %p273 = pnand %p271, %p272
      %p274 = pneg %p273
      // Predicated region
      $region9: #{tpu_custom_call.1} parent=5 // pred_check
        _
      $region10: #{tpu_custom_call.1} parent=5 // pred_check_branch
        %276 = sbr.rel (%p273) target = $region12
      $region11: #{tpu_custom_call.1} parent=5 // pred_region
        %s277 = ssub.s32 %s22, 1
        // Predicated region
        $region13: #{tpu_custom_call.1} parent=11 // pred_check
          %p278 = pneg %p69
        $region14: #{tpu_custom_call.1} parent=11 // pred_check_branch
          %280 = sbr.rel (%p278) target = $region16
        $region15: #{tpu_custom_call.1} parent=11 // pred_region
          _
        $region16: #{tpu_custom_call.1} parent=11 // pred_fallthru
          _
        // Predicated region
        $region17: #{tpu_custom_call.1} parent=11 // pred_check
          %p281 = pneg %p90
        $region18: #{tpu_custom_call.1} parent=11 // pred_check_branch
          %283 = sbr.rel (%p281) target = $region20
        $region19: #{tpu_custom_call.1} parent=11 // pred_region
          _
        $region20: #{tpu_custom_call.1} parent=11 // pred_fallthru
          _
        // Predicated region
        $region21: #{tpu_custom_call.1} parent=11 // pred_check
          %p284 = pneg %p111
        $region22: #{tpu_custom_call.1} parent=11 // pred_check_branch
          %286 = sbr.rel (%p284) target = $region24
        $region23: #{tpu_custom_call.1} parent=11 // pred_region
          _
        $region24: #{tpu_custom_call.1} parent=11 // pred_fallthru
          _
        // Predicated region
        $region25: #{tpu_custom_call.1} parent=11 // pred_check
          %p287 = pneg %p132
        $region26: #{tpu_custom_call.1} parent=11 // pred_check_branch
          %289 = sbr.rel (%p287) target = $region28
        $region27: #{tpu_custom_call.1} parent=11 // pred_region
          _
        $region28: #{tpu_custom_call.1} parent=11 // pred_fallthru
          _
        // Predicated region
        $region29: #{tpu_custom_call.1} parent=11 // pred_check
          %p290 = pneg %p153
        $region30: #{tpu_custom_call.1} parent=11 // pred_check_branch
          %292 = sbr.rel (%p290) target = $region32
        $region31: #{tpu_custom_call.1} parent=11 // pred_region
          _
        $region32: #{tpu_custom_call.1} parent=11 // pred_fallthru
          _
        // Predicated region
        $region33: #{tpu_custom_call.1} parent=11 // pred_check
          %p293 = pneg %p174
        $region34: #{tpu_custom_call.1} parent=11 // pred_check_branch
          %295 = sbr.rel (%p293) target = $region36
        $region35: #{tpu_custom_call.1} parent=11 // pred_region
          _
        $region36: #{tpu_custom_call.1} parent=11 // pred_fallthru
          _
        // Predicated region
        $region37: #{tpu_custom_call.1} parent=11 // pred_check
          %p296 = pneg %p195
        $region38: #{tpu_custom_call.1} parent=11 // pred_check_branch
          %298 = sbr.rel (%p296) target = $region40
        $region39: #{tpu_custom_call.1} parent=11 // pred_region
          _
        $region40: #{tpu_custom_call.1} parent=11 // pred_fallthru
          _
        // Predicated region
        $region41: #{tpu_custom_call.1} parent=11 // pred_check
          %p299 = pneg %p216
        $region42: #{tpu_custom_call.1} parent=11 // pred_check_branch
          %301 = sbr.rel (%p299) target = $region44
        $region43: #{tpu_custom_call.1} parent=11 // pred_region
          _
        $region44: #{tpu_custom_call.1} parent=11 // pred_fallthru
          _
        // Predicated region
        $region45: #{tpu_custom_call.1} parent=11 // pred_check
          %p302 = pneg %p237
        $region46: #{tpu_custom_call.1} parent=11 // pred_check_branch
          %304 = sbr.rel (%p302) target = $region48
        $region47: #{tpu_custom_call.1} parent=11 // pred_region
          _
        $region48: #{tpu_custom_call.1} parent=11 // pred_fallthru
          _
      $region12: #{tpu_custom_call.1} parent=5 // pred_fallthru
        _
      %p305 = scmp.lt.s32.totalorder %s22, 2
      // Predicated region
      $region49: #{tpu_custom_call.1} parent=5 // pred_check
        %p306 = pneg %p305
      $region50: #{tpu_custom_call.1} parent=5 // pred_check_branch
        %308 = sbr.rel (%p306) target = $region52
      $region51: #{tpu_custom_call.1} parent=5 // pred_region
        // Predicated region
        $region53: #{tpu_custom_call.1} parent=51 // pred_check
          %p309 = pneg %p42
        $region54: #{tpu_custom_call.1} parent=51 // pred_check_branch
          %311 = sbr.rel (%p309) target = $region56
        $region55: #{tpu_custom_call.1} parent=51 // pred_region
          %s312 = sand.u32 %s32, 1
          %s313 = scalar_lea.sflag [#allocation3], %s312
          %s314 = sand.u32 %s32, 1
          %s315 = smul.addr %s314, 128
          %s316 = scalar_lea.vmem [#allocation2], %s315
          %s318 = ssub.s32 2048, 2048
          %319 = vsyncadd %s313, %s318
          %s320 = smul.addr %s22, 32
          %s321 = smul.addr %s320, 64
          %s322 = scalar_lea.hbm %s0, %s321
          %s323 = sshll.u32 %s316, 4
          %s324 = int_to_ptr.vmem [resolvable:$true] %s323
          %329 = dma.hbm_to_vmem [thread:$0]  %s322, 2048, %s324, %s313, 128, 128, 8
        $region56: #{tpu_custom_call.1} parent=51 // pred_fallthru
          _
      $region52: #{tpu_custom_call.1} parent=5 // pred_fallthru
        _
      %p330 = scmp.le.s32.totalorder 1, %s22
      %p331 = scmp.lt.s32.totalorder %s22, 3
      %p332 = pnand %p330, %p331
      %p333 = pneg %p332
      // Predicated region
      $region57: #{tpu_custom_call.1} parent=5 // pred_check
        _
      $region58: #{tpu_custom_call.1} parent=5 // pred_check_branch
        %335 = sbr.rel (%p332) target = $region60
      $region59: #{tpu_custom_call.1} parent=5 // pred_region
        %s336 = ssub.s32 %s22, 1
        %s337 = sand.u32 %s35, 1
        %s338 = scalar_lea.sflag [#allocation3], %s337
        %s339 = sand.u32 %s35, 1
        %s340 = smul.addr %s339, 128
        %s341 = scalar_lea.vmem [#allocation2], %s340
        // Predicated region
        $region61: #{tpu_custom_call.1} parent=59 // pred_check
          %p342 = pneg %p48
        $region62: #{tpu_custom_call.1} parent=59 // pred_check_branch
          %344 = sbr.rel (%p342) target = $region64
        $region63: #{tpu_custom_call.1} parent=59 // pred_region
          %345 = dma.done %s338, 2048
        $region64: #{tpu_custom_call.1} parent=59 // pred_fallthru
          _
        %s346 = sand.u32 %s35, 1
        %s347 = scalar_lea.sflag [#allocation3], %s346
        %s348 = sand.u32 %s35, 1
        %s349 = smul.addr %s348, 128
        %s350 = scalar_lea.vmem [#allocation2], %s349
        %p351 = pneg %p48
        %p352 = pneg %p45
        %p353 = pneg %p69
        %p354 = pneg %p66
        %p355 = pneg %p90
        %p356 = pneg %p87
        %p357 = pneg %p111
        %p358 = pneg %p108
        %p359 = pneg %p132
        %p360 = pneg %p129
        %p361 = pneg %p153
        %p362 = pneg %p150
        %p363 = pneg %p174
        %p364 = pneg %p171
        %p365 = pneg %p195
        %p366 = pneg %p192
        %p367 = pneg %p216
        %p368 = pneg %p213
        %p369 = pneg %p237
        %p370 = pneg %p234
        %p371 = pneg %p263
        %p372 = pneg %p260
        %s373 = sand.u32 %s250, 1
        %s374 = scalar_lea.sflag [#allocation4], %s373
        %s375 = sand.u32 %s250, 1
        %s376 = smul.addr %s375, 64
        %s377 = scalar_lea.vmem [#allocation5], %s376
        %v379 = vld [vmem:[%s341] sm:$0xff]
        %v380 = vld [vmem:[%s341 + $0x8] sm:$0xff]
        %v381 = vld [vmem:[%s341 + $0x10] sm:$0xff]
        %v382 = vld [vmem:[%s341 + $0x18] sm:$0xff]
        %v383 = vld [vmem:[%s341 + $0x20] sm:$0xff]
        %v384 = vld [vmem:[%s341 + $0x28] sm:$0xff]
        %v385 = vld [vmem:[%s341 + $0x30] sm:$0xff]
        %v386 = vld [vmem:[%s341 + $0x38] sm:$0xff]
        %v387 = vld [vmem:[%s341 + $0x40] sm:$0xff]
        %v388 = vld [vmem:[%s341 + $0x48] sm:$0xff]
        %v389 = vld [vmem:[%s341 + $0x50] sm:$0xff]
        %v390 = vld [vmem:[%s341 + $0x58] sm:$0xff]
        %v391 = vld [vmem:[%s341 + $0x60] sm:$0xff]
        %v392 = vld [vmem:[%s341 + $0x68] sm:$0xff]
        %v393 = vld [vmem:[%s341 + $0x70] sm:$0xff]
        %v394 = vld [vmem:[%s341 + $0x78] sm:$0xff]
        %v395 = vunpack.c.l.bf16 %v379
        %v396 = vunpack.c.h.bf16 %v379
        %v397 = vunpack.c.l.bf16 %v380
        %v398 = vunpack.c.h.bf16 %v380
        %v399 = vunpack.c.l.bf16 %v381
        %v400 = vunpack.c.h.bf16 %v381
        %v401 = vunpack.c.l.bf16 %v382
        %v402 = vunpack.c.h.bf16 %v382
        %v403 = vunpack.c.l.bf16 %v383
        %v404 = vunpack.c.h.bf16 %v383
        %v405 = vunpack.c.l.bf16 %v384
        %v406 = vunpack.c.h.bf16 %v384
        %v407 = vunpack.c.l.bf16 %v385
        %v408 = vunpack.c.h.bf16 %v385
        %v409 = vunpack.c.l.bf16 %v386
        %v410 = vunpack.c.h.bf16 %v386
        %v411 = vunpack.c.l.bf16 %v387
        %v412 = vunpack.c.h.bf16 %v387
        %v413 = vunpack.c.l.bf16 %v388
        %v414 = vunpack.c.h.bf16 %v388
        %v415 = vunpack.c.l.bf16 %v389
        %v416 = vunpack.c.h.bf16 %v389
        %v417 = vunpack.c.l.bf16 %v390
        %v418 = vunpack.c.h.bf16 %v390
        %v419 = vunpack.c.l.bf16 %v391
        %v420 = vunpack.c.h.bf16 %v391
        %v421 = vunpack.c.l.bf16 %v392
        %v422 = vunpack.c.h.bf16 %v392
        %v423 = vunpack.c.l.bf16 %v393
        %v424 = vunpack.c.h.bf16 %v393
        %v425 = vunpack.c.l.bf16 %v394
        %v426 = vunpack.c.h.bf16 %v394
        %v427 = vadd.f32 %v395, %v396
        %428 = vadd.xlane.f32.xlu0 %v427
        %v429 = vpop.xlane.xlu0 %428
        %v430 = vadd.f32 %v397, %v398
        %431 = vadd.xlane.f32.xlu0 %v430
        %v432 = vpop.xlane.xlu0 %431
        %v433 = vadd.f32 %v399, %v400
        %434 = vadd.xlane.f32.xlu0 %v433
        %v435 = vpop.xlane.xlu0 %434
        %v436 = vadd.f32 %v401, %v402
        %437 = vadd.xlane.f32.xlu0 %v436
        %v438 = vpop.xlane.xlu0 %437
        %v439 = vadd.f32 %v403, %v404
        %440 = vadd.xlane.f32.xlu0 %v439
        %v441 = vpop.xlane.xlu0 %440
        %v442 = vadd.f32 %v405, %v406
        %443 = vadd.xlane.f32.xlu0 %v442
        %v444 = vpop.xlane.xlu0 %443
        %v445 = vadd.f32 %v407, %v408
        %446 = vadd.xlane.f32.xlu0 %v445
        %v447 = vpop.xlane.xlu0 %446
        %v448 = vadd.f32 %v409, %v410
        %449 = vadd.xlane.f32.xlu0 %v448
        %v450 = vpop.xlane.xlu0 %449
        %v451 = vadd.f32 %v411, %v412
        %452 = vadd.xlane.f32.xlu0 %v451
        %v453 = vpop.xlane.xlu0 %452
        %v454 = vadd.f32 %v413, %v414
        %455 = vadd.xlane.f32.xlu0 %v454
        %v456 = vpop.xlane.xlu0 %455
        %v457 = vadd.f32 %v415, %v416
        %458 = vadd.xlane.f32.xlu0 %v457
        %v459 = vpop.xlane.xlu0 %458
        %v460 = vadd.f32 %v417, %v418
        %461 = vadd.xlane.f32.xlu0 %v460
        %v462 = vpop.xlane.xlu0 %461
        %v463 = vadd.f32 %v419, %v420
        %464 = vadd.xlane.f32.xlu0 %v463
        %v465 = vpop.xlane.xlu0 %464
        %v466 = vadd.f32 %v421, %v422
        %467 = vadd.xlane.f32.xlu0 %v466
        %v468 = vpop.xlane.xlu0 %467
        %v469 = vadd.f32 %v423, %v424
        %470 = vadd.xlane.f32.xlu0 %v469
        %v471 = vpop.xlane.xlu0 %470
        %v472 = vadd.f32 %v425, %v426
        %473 = vadd.xlane.f32.xlu0 %v472
        %v474 = vpop.xlane.xlu0 %473
        %v475 = vmul.f32 %v429, 0.00390625
        %v476 = vmul.f32 %v432, 0.00390625
        %v477 = vmul.f32 %v435, 0.00390625
        %v478 = vmul.f32 %v438, 0.00390625
        %v479 = vmul.f32 %v441, 0.00390625
        %v480 = vmul.f32 %v444, 0.00390625
        %v481 = vmul.f32 %v447, 0.00390625
        %v482 = vmul.f32 %v450, 0.00390625
        %v483 = vmul.f32 %v453, 0.00390625
        %v484 = vmul.f32 %v456, 0.00390625
        %v485 = vmul.f32 %v459, 0.00390625
        %v486 = vmul.f32 %v462, 0.00390625
        %v487 = vmul.f32 %v465, 0.00390625
        %v488 = vmul.f32 %v468, 0.00390625
        %v489 = vmul.f32 %v471, 0.00390625
        %v490 = vmul.f32 %v474, 0.00390625
        %v491 = vld [vmem:[%s1] sm:$0xff]
        %v492 = vld [vmem:[%s1 + $0x8] sm:$0xff]
        %v493 = vld [vmem:[%s1 + $0x10] sm:$0xff]
        %v494 = vld [vmem:[%s1 + $0x18] sm:$0xff]
        %v495 = vld [vmem:[%s1 + $0x20] sm:$0xff]
        %v496 = vld [vmem:[%s1 + $0x28] sm:$0xff]
        %v497 = vld [vmem:[%s1 + $0x30] sm:$0xff]
        %v498 = vld [vmem:[%s1 + $0x38] sm:$0xff]
        %v499 = vld [vmem:[%s1 + $0x40] sm:$0xff]
        %v500 = vld [vmem:[%s1 + $0x48] sm:$0xff]
        %v501 = vld [vmem:[%s1 + $0x50] sm:$0xff]
        %v502 = vld [vmem:[%s1 + $0x58] sm:$0xff]
        %v503 = vld [vmem:[%s1 + $0x60] sm:$0xff]
        %v504 = vld [vmem:[%s1 + $0x68] sm:$0xff]
        %v505 = vld [vmem:[%s1 + $0x70] sm:$0xff]
        %v506 = vld [vmem:[%s1 + $0x78] sm:$0xff]
        %v507 = vmul.f32 %v475, %v491
        %v508 = vmul.f32 %v476, %v492
        %v509 = vmul.f32 %v477, %v493
        %v510 = vmul.f32 %v478, %v494
        %v511 = vmul.f32 %v479, %v495
        %v512 = vmul.f32 %v480, %v496
        %v513 = vmul.f32 %v481, %v497
        %v514 = vmul.f32 %v482, %v498
        %v515 = vmul.f32 %v483, %v499
        %v516 = vmul.f32 %v484, %v500
        %v517 = vmul.f32 %v485, %v501
        %v518 = vmul.f32 %v486, %v502
        %v519 = vmul.f32 %v487, %v503
        %v520 = vmul.f32 %v488, %v504
        %v521 = vmul.f32 %v489, %v505
        %v522 = vmul.f32 %v490, %v506
        %vm523 = vcmask 130048
        %v524 = vsel %vm523, %v507, 0.0
        %v525 = vsel %vm523, %v508, 0.0
        %v526 = vadd.f32 %v524, %v525
        %v527 = vsel %vm523, %v509, 0.0
        %v528 = vadd.f32 %v526, %v527
        %v529 = vsel %vm523, %v510, 0.0
        %v530 = vadd.f32 %v528, %v529
        %v531 = vsel %vm523, %v511, 0.0
        %v532 = vadd.f32 %v530, %v531
        %v533 = vsel %vm523, %v512, 0.0
        %v534 = vadd.f32 %v532, %v533
        %v535 = vsel %vm523, %v513, 0.0
        %v536 = vadd.f32 %v534, %v535
        %v537 = vsel %vm523, %v514, 0.0
        %v538 = vadd.f32 %v536, %v537
        %v539 = vsel %vm523, %v515, 0.0
        %v540 = vadd.f32 %v538, %v539
        %v541 = vsel %vm523, %v516, 0.0
        %v542 = vadd.f32 %v540, %v541
        %v543 = vsel %vm523, %v517, 0.0
        %v544 = vadd.f32 %v542, %v543
        %v545 = vsel %vm523, %v518, 0.0
        %v546 = vadd.f32 %v544, %v545
        %v547 = vsel %vm523, %v519, 0.0
        %v548 = vadd.f32 %v546, %v547
        %v549 = vsel %vm523, %v520, 0.0
        %v550 = vadd.f32 %v548, %v549
        %v551 = vsel %vm523, %v521, 0.0
        %v552 = vadd.f32 %v550, %v551
        %v553 = vsel %vm523, %v522, 0.0
        %v554 = vadd.f32 %v552, %v553
        %v555 = vrot.slane %v554, 4
        %v556 = vadd.f32 %v554, %v555
        %v557 = vrot.slane %v556, 2
        %v558 = vadd.f32 %v556, %v557
        %v559 = vrot.slane %v558, 1
        %v560 = vadd.f32 %v558, %v559
        %v561 = vld [vmem:[%s2] sm:$0x1]
        %v562 = vadd.f32 %v560, %v561
        %v563 = vmax.f32 %v562, 0.0
        %v564 = vld [vmem:[%s3] sm:$0xf]
        %v565 = vlaneseq
        %v566 = vshrl.u32 %v565, 7
        %v567 = vsub.s32 0, %v566
        %v568 = vrot.slane %v563, %v567
        %v569 = vmul.f32 %v564, %v568
        %vm570 = vcmask 125952
        %v571 = vsel %vm570, %v569, 0.0
        %572 = vadd.xlane.f32.xlu0 %v571
        %v573 = vpop.xlane.xlu0 %572
        %v574 = vld [vmem:[%s4] sm:$0xf]
        %v575 = vadd.f32 %v573, %v574
        %v576 = vxor.u32 %v575, 2147483648
        %v577 = vmul.f32 %v576, 1.442695
        %v578 = vpow.pop %v577
        %v579 = vadd.f32 %v578, 1.0
        %v580 = vrcp.pop %v579
        %v581 = vmul.f32 1.0, %v580
        %v582 = vld [vmem:[%s8] sm:$0xf]
        %584 = vset.pattern.permute.xlu0 0
        %585 = vperm.xlu0 %584, %v581
        %v586 = vpop.permute.xlu0 %585
        %v588 = vmul.f32 %v586, %v582
        %vm589 = vcmask 1043456
        %v590 = vsel %vm589, %v588, 0.0
        %v591 = vrot.slane %v590, 4
        %v592 = vadd.f32 %v590, %v591
        %v593 = vrot.slane %v592, 2
        %v594 = vadd.f32 %v592, %v593
        %v595 = vrot.slane %v594, 1
        %v596 = vadd.f32 %v594, %v595
        %v597 = vld [vmem:[%s5] sm:$0xff]
        %v598 = vld [vmem:[%s5 + $0x8] sm:$0xff]
        %v599 = vld [vmem:[%s5 + $0x10] sm:$0xff]
        %v600 = vld [vmem:[%s5 + $0x18] sm:$0xff]
        %v601 = vmul.f32 %v597, %v596
        %v602 = vmul.f32 %v598, %v596
        %v603 = vmul.f32 %v599, %v596
        %v604 = vmul.f32 %v600, %v596
        %v605 = vpack.c.bf16 %v602, %v601
        %v606 = vpack.c.bf16 %v604, %v603
        %v623 = vunpack.c.l.b16 %v379
        %v624 = vunpack.c.h.b16 %v379
        %v625 = vunpack.c.l.b16 %v380
        %v626 = vunpack.c.h.b16 %v380
        %v627 = vunpack.c.l.b16 %v381
        %v628 = vunpack.c.h.b16 %v381
        %v629 = vunpack.c.l.b16 %v382
        %v630 = vunpack.c.h.b16 %v382
        %v631 = vunpack.c.l.b16 %v383
        %v632 = vunpack.c.h.b16 %v383
        %v633 = vunpack.c.l.b16 %v384
        %v634 = vunpack.c.h.b16 %v384
        %v635 = vunpack.c.l.b16 %v385
        %v636 = vunpack.c.h.b16 %v385
        %v637 = vunpack.c.l.b16 %v386
        %v638 = vunpack.c.h.b16 %v386
        %v639 = vunpack.c.l.b16 %v387
        %v640 = vunpack.c.h.b16 %v387
        %v641 = vunpack.c.l.b16 %v388
        %v642 = vunpack.c.h.b16 %v388
        %v643 = vunpack.c.l.b16 %v389
        %v644 = vunpack.c.h.b16 %v389
        %v645 = vunpack.c.l.b16 %v390
        %v646 = vunpack.c.h.b16 %v390
        %v647 = vunpack.c.l.b16 %v391
        %v648 = vunpack.c.h.b16 %v391
        %v649 = vunpack.c.l.b16 %v392
        %v650 = vunpack.c.h.b16 %v392
        %v651 = vunpack.c.l.b16 %v393
        %v652 = vunpack.c.h.b16 %v393
        %v653 = vunpack.c.l.b16 %v394
        %v654 = vunpack.c.h.b16 %v394
        %v655 = vpack.c.b16 %v625, %v623
        %v656 = vpack.c.b16 %v626, %v624
        %v657 = vpack.c.b16 %v629, %v627
        %v658 = vpack.c.b16 %v630, %v628
        %v659 = vpack.c.b16 %v633, %v631
        %v660 = vpack.c.b16 %v634, %v632
        %v661 = vpack.c.b16 %v637, %v635
        %v662 = vpack.c.b16 %v638, %v636
        %v663 = vpack.c.b16 %v641, %v639
        %v664 = vpack.c.b16 %v642, %v640
        %v665 = vpack.c.b16 %v645, %v643
        %v666 = vpack.c.b16 %v646, %v644
        %v667 = vpack.c.b16 %v649, %v647
        %v668 = vpack.c.b16 %v650, %v648
        %v669 = vpack.c.b16 %v653, %v651
        %v670 = vpack.c.b16 %v654, %v652
        %687 = vmatprep.subr.bf16.mxu0 %v670
        %688 = vmatpush1.bf16.msra.mxu0 %v669
        %689 = vmatprep.subr.bf16.mxu0 %v668
        %690 = vmatpush1.bf16.msra.mxu0 %v667
        %691 = vmatprep.subr.bf16.mxu0 %v666
        %692 = vmatpush1.bf16.msra.mxu0 %v665
        %693 = vmatprep.subr.bf16.mxu0 %v664
        %694 = vmatpush1.bf16.msra.mxu0 %v663
        %695 = vmatprep.subr.bf16.mxu0 %v662
        %696 = vmatpush1.bf16.msra.mxu0 %v661
        %697 = vmatprep.subr.bf16.mxu0 %v660
        %698 = vmatpush1.bf16.msra.mxu0 %v659
        %699 = vmatprep.subr.bf16.mxu0 %v658
        %700 = vmatpush1.bf16.msra.mxu0 %v657
        %701 = vmatprep.subr.bf16.mxu0 %v656
        %702 = vmatpush1.bf16.msra.mxu0 %v655
        %703 = vmatprep.subr.bf16.mxu0 0
        %704 = vmatpush2.bf16.msra.mxu0 0
        %705 = vmatprep.subr.bf16.mxu0 0
        %706 = vmatpush2.bf16.msra.mxu0 0
        %707 = vmatprep.subr.bf16.mxu0 0
        %708 = vmatpush2.bf16.msra.mxu0 0
        %709 = vmatprep.subr.bf16.mxu0 0
        %710 = vmatpush2.bf16.msra.mxu0 0
        %711 = vmatprep.subr.bf16.mxu0 0
        %712 = vmatpush2.bf16.msra.mxu0 0
        %713 = vmatprep.subr.bf16.mxu0 0
        %714 = vmatpush2.bf16.msra.mxu0 0
        %715 = vmatprep.subr.bf16.mxu0 0
        %716 = vmatpush2.bf16.msra.mxu0 0
        %717 = vmatprep.subr.bf16.mxu0 0
        %718 = vmatpush2.bf16.msra.mxu0 0
        %719 = vmatprep.mubr.bf16.mxu0 0
        %720 = vmatmul.mubr.bf16.gmra.mxu0 %v605
        %v721 = vpop.f32.mrf.mxu0
        %v722 = vadd.f32 0.0, %v721
        %v723 = vpop.f32.mrf.mxu0
        %v724 = vadd.f32 0.0, %v723
        %v725 = vpop.f32.mrf.mxu0
        %v726 = vadd.f32 0.0, %v725
        %v727 = vpop.f32.mrf.mxu0
        %v728 = vadd.f32 0.0, %v727
        %729 = vmatprep.mubr.bf16.mxu0 0
        %730 = vmatmul.mubr.bf16.gmra.mxu0 %v606
        %v731 = vpop.f32.mrf.mxu0
        %v732 = vadd.f32 0.0, %v731
        %v733 = vpop.f32.mrf.mxu0
        %v734 = vadd.f32 0.0, %v733
        %v735 = vpop.f32.mrf.mxu0
        %v736 = vadd.f32 0.0, %v735
        %v737 = vpop.f32.mrf.mxu0
        %v738 = vadd.f32 0.0, %v737
        %739 = vdwg.mxu0
        %v740 = vadd.f32 %v722, %v724
        %741 = vadd.xlane.f32.xlu0 %v740
        %v742 = vpop.xlane.xlu0 %741
        %v743 = vadd.f32 %v726, %v728
        %744 = vadd.xlane.f32.xlu0 %v743
        %v745 = vpop.xlane.xlu0 %744
        %v746 = vadd.f32 %v732, %v734
        %747 = vadd.xlane.f32.xlu0 %v746
        %v748 = vpop.xlane.xlu0 %747
        %v749 = vadd.f32 %v736, %v738
        %750 = vadd.xlane.f32.xlu0 %v749
        %v751 = vpop.xlane.xlu0 %750
        %v752 = vmul.f32 %v722, %v722
        %v753 = vmul.f32 %v724, %v724
        %v754 = vmul.f32 %v726, %v726
        %v755 = vmul.f32 %v728, %v728
        %v756 = vmul.f32 %v732, %v732
        %v757 = vmul.f32 %v734, %v734
        %v758 = vmul.f32 %v736, %v736
        %v759 = vmul.f32 %v738, %v738
        %v760 = vadd.f32 %v752, %v753
        %761 = vadd.xlane.f32.xlu0 %v760
        %v762 = vpop.xlane.xlu0 %761
        %v763 = vadd.f32 %v754, %v755
        %764 = vadd.xlane.f32.xlu0 %v763
        %v765 = vpop.xlane.xlu0 %764
        %v766 = vadd.f32 %v756, %v757
        %767 = vadd.xlane.f32.xlu0 %v766
        %v768 = vpop.xlane.xlu0 %767
        %v769 = vadd.f32 %v758, %v759
        %770 = vadd.xlane.f32.xlu0 %v769
        %v771 = vpop.xlane.xlu0 %770
        %v772 = vld [vmem:[%s9] sm:$0xff]
        %v773 = vld [vmem:[%s9 + $0x8] sm:$0xff]
        %v774 = vld [vmem:[%s9 + $0x10] sm:$0xff]
        %v775 = vld [vmem:[%s9 + $0x18] sm:$0xff]
        %vm776 = vcmask 261120
        %v778 = vsel %vm776, %v772, 0
        %v781 = vsel %vm776, %v773, 0
        %v784 = vsel %vm776, %v774, 0
        %v787 = vsel %vm776, %v775, 0
        %789 = vmatprep.subr.mxu0 0.0
        %790 = vmatpush1.msra.mxu0 0.0
        %791 = vmatprep.subr.mxu0 0.0
        %792 = vmatpush1.msra.mxu0 0.0
        %793 = vmatprep.subr.mxu0 0.0
        %794 = vmatpush1.msra.mxu0 0.0
        %795 = vmatprep.subr.mxu0 0.0
        %796 = vmatpush1.msra.mxu0 0.0
        %797 = vmatprep.subr.mxu0 0.0
        %798 = vmatpush1.msra.mxu0 0.0
        %799 = vmatprep.subr.mxu0 0.0
        %800 = vmatpush1.msra.mxu0 0.0
        %801 = vmatprep.subr.mxu0 0.0
        %802 = vmatpush1.msra.mxu0 0.0
        %803 = vmatprep.subr.mxu0 0.0
        %804 = vmatpush1.msra.mxu0 0.0
        %805 = vmatprep.subr.mxu0 0.0
        %806 = vmatpush1.msra.mxu0 0.0
        %807 = vmatprep.subr.mxu0 0.0
        %808 = vmatpush1.msra.mxu0 0.0
        %809 = vmatprep.subr.mxu0 0.0
        %810 = vmatpush1.msra.mxu0 0.0
        %811 = vmatprep.subr.mxu0 0.0
        %812 = vmatpush1.msra.mxu0 0.0
        %813 = vmatprep.subr.mxu0 0.0
        %814 = vmatpush1.msra.mxu0 %v751
        %815 = vmatprep.subr.mxu0 0.0
        %816 = vmatpush1.msra.mxu0 %v748
        %817 = vmatprep.subr.mxu0 0.0
        %818 = vmatpush1.msra.mxu0 %v745
        %819 = vmatprep.subr.mxu0 0.0
        %820 = vmatpush1.msra.mxu0 %v742
        %821 = vmatprep.subr.mxu0 0.0
        %822 = vmatpush2.msra.mxu0 0.0
        %823 = vmatprep.subr.mxu0 0.0
        %824 = vmatpush2.msra.mxu0 0.0
        %825 = vmatprep.subr.mxu0 0.0
        %826 = vmatpush2.msra.mxu0 0.0
        %827 = vmatprep.subr.mxu0 0.0
        %828 = vmatpush2.msra.mxu0 0.0
        %829 = vmatprep.subr.mxu0 0.0
        %830 = vmatpush2.msra.mxu0 0.0
        %831 = vmatprep.subr.mxu0 0.0
        %832 = vmatpush2.msra.mxu0 0.0
        %833 = vmatprep.subr.mxu0 0.0
        %834 = vmatpush2.msra.mxu0 0.0
        %835 = vmatprep.subr.mxu0 0.0
        %836 = vmatpush2.msra.mxu0 0.0
        %837 = vmatprep.subr.mxu0 0.0
        %838 = vmatpush2.msra.mxu0 0.0
        %839 = vmatprep.subr.mxu0 0.0
        %840 = vmatpush2.msra.mxu0 0.0
        %841 = vmatprep.subr.mxu0 0.0
        %842 = vmatpush2.msra.mxu0 0.0
        %843 = vmatprep.subr.mxu0 0.0
        %844 = vmatpush2.msra.mxu0 0.0
        %845 = vmatprep.subr.mxu0 0.0
        %846 = vmatpush2.msra.mxu0 0.0
        %847 = vmatprep.subr.mxu0 0.0
        %848 = vmatpush2.msra.mxu0 0.0
        %849 = vmatprep.subr.mxu0 0.0
        %850 = vmatpush2.msra.mxu0 0.0
        %851 = vmatprep.subr.mxu0 0.0
        %852 = vmatpush2.msra.mxu0 0.0
        %853 = vmatprep.mubr.f32.mxu0 0.0
        %854 = vmatmul.mubr.f32.gmra.mxu0 %v778
        %v855 = vpop.f32.mrf.mxu0
        %v856 = vadd.f32 0.0, %v855
        %v857 = vpop.f32.mrf.mxu0
        %858 = vmatprep.mubr.f32.mxu0 0.0
        %859 = vmatmul.mubr.f32.gmra.mxu0 %v781
        %v860 = vpop.f32.mrf.mxu0
        %v861 = vadd.f32 0.0, %v860
        %v862 = vpop.f32.mrf.mxu0
        %863 = vmatprep.mubr.f32.mxu0 0.0
        %864 = vmatmul.mubr.f32.gmra.mxu0 %v784
        %v865 = vpop.f32.mrf.mxu0
        %v866 = vadd.f32 0.0, %v865
        %v867 = vpop.f32.mrf.mxu0
        %868 = vmatprep.mubr.f32.mxu0 0.0
        %869 = vmatmul.mubr.f32.gmra.mxu0 %v787
        %v870 = vpop.f32.mrf.mxu0
        %v871 = vadd.f32 0.0, %v870
        %v872 = vpop.f32.mrf.mxu0
        %873 = vdwg.mxu0
        %874 = vmatprep.subr.mxu0 0.0
        %875 = vmatpush1.msra.mxu0 0.0
        %876 = vmatprep.subr.mxu0 0.0
        %877 = vmatpush1.msra.mxu0 0.0
        %878 = vmatprep.subr.mxu0 0.0
        %879 = vmatpush1.msra.mxu0 0.0
        %880 = vmatprep.subr.mxu0 0.0
        %881 = vmatpush1.msra.mxu0 0.0
        %882 = vmatprep.subr.mxu0 0.0
        %883 = vmatpush1.msra.mxu0 0.0
        %884 = vmatprep.subr.mxu0 0.0
        %885 = vmatpush1.msra.mxu0 0.0
        %886 = vmatprep.subr.mxu0 0.0
        %887 = vmatpush1.msra.mxu0 0.0
        %888 = vmatprep.subr.mxu0 0.0
        %889 = vmatpush1.msra.mxu0 0.0
        %890 = vmatprep.subr.mxu0 0.0
        %891 = vmatpush1.msra.mxu0 0.0
        %892 = vmatprep.subr.mxu0 0.0
        %893 = vmatpush1.msra.mxu0 0.0
        %894 = vmatprep.subr.mxu0 0.0
        %895 = vmatpush1.msra.mxu0 0.0
        %896 = vmatprep.subr.mxu0 0.0
        %897 = vmatpush1.msra.mxu0 0.0
        %898 = vmatprep.subr.mxu0 0.0
        %899 = vmatpush1.msra.mxu0 %v771
        %900 = vmatprep.subr.mxu0 0.0
        %901 = vmatpush1.msra.mxu0 %v768
        %902 = vmatprep.subr.mxu0 0.0
        %903 = vmatpush1.msra.mxu0 %v765
        %904 = vmatprep.subr.mxu0 0.0
        %905 = vmatpush1.msra.mxu0 %v762
        %906 = vmatprep.subr.mxu0 0.0
        %907 = vmatpush2.msra.mxu0 0.0
        %908 = vmatprep.subr.mxu0 0.0
        %909 = vmatpush2.msra.mxu0 0.0
        %910 = vmatprep.subr.mxu0 0.0
        %911 = vmatpush2.msra.mxu0 0.0
        %912 = vmatprep.subr.mxu0 0.0
        %913 = vmatpush2.msra.mxu0 0.0
        %914 = vmatprep.subr.mxu0 0.0
        %915 = vmatpush2.msra.mxu0 0.0
        %916 = vmatprep.subr.mxu0 0.0
        %917 = vmatpush2.msra.mxu0 0.0
        %918 = vmatprep.subr.mxu0 0.0
        %919 = vmatpush2.msra.mxu0 0.0
        %920 = vmatprep.subr.mxu0 0.0
        %921 = vmatpush2.msra.mxu0 0.0
        %922 = vmatprep.subr.mxu0 0.0
        %923 = vmatpush2.msra.mxu0 0.0
        %924 = vmatprep.subr.mxu0 0.0
        %925 = vmatpush2.msra.mxu0 0.0
        %926 = vmatprep.subr.mxu0 0.0
        %927 = vmatpush2.msra.mxu0 0.0
        %928 = vmatprep.subr.mxu0 0.0
        %929 = vmatpush2.msra.mxu0 0.0
        %930 = vmatprep.subr.mxu0 0.0
        %931 = vmatpush2.msra.mxu0 0.0
        %932 = vmatprep.subr.mxu0 0.0
        %933 = vmatpush2.msra.mxu0 0.0
        %934 = vmatprep.subr.mxu0 0.0
        %935 = vmatpush2.msra.mxu0 0.0
        %936 = vmatprep.subr.mxu0 0.0
        %937 = vmatpush2.msra.mxu0 0.0
        %938 = vmatprep.mubr.f32.mxu0 0.0
        %939 = vmatmul.mubr.f32.gmra.mxu0 %v778
        %v940 = vpop.f32.mrf.mxu0
        %v941 = vadd.f32 0.0, %v940
        %v942 = vpop.f32.mrf.mxu0
        %943 = vmatprep.mubr.f32.mxu0 0.0
        %944 = vmatmul.mubr.f32.gmra.mxu0 %v781
        %v945 = vpop.f32.mrf.mxu0
        %v946 = vadd.f32 0.0, %v945
        %v947 = vpop.f32.mrf.mxu0
        %948 = vmatprep.mubr.f32.mxu0 0.0
        %949 = vmatmul.mubr.f32.gmra.mxu0 %v784
        %v950 = vpop.f32.mrf.mxu0
        %v951 = vadd.f32 0.0, %v950
        %v952 = vpop.f32.mrf.mxu0
        %953 = vmatprep.mubr.f32.mxu0 0.0
        %954 = vmatmul.mubr.f32.gmra.mxu0 %v787
        %v955 = vpop.f32.mrf.mxu0
        %v956 = vadd.f32 0.0, %v955
        %v957 = vpop.f32.mrf.mxu0
        %958 = vdwg.mxu0
        %v959 = vmul.f32 %v856, 0.001953125
        %v960 = vmul.f32 %v861, 0.001953125
        %v961 = vmul.f32 %v866, 0.001953125
        %v962 = vmul.f32 %v871, 0.001953125
        %v963 = vmul.f32 %v941, 0.001953125
        %v964 = vmul.f32 %v946, 0.001953125
        %v965 = vmul.f32 %v951, 0.001953125
        %v966 = vmul.f32 %v956, 0.001953125
        %v967 = vmul.f32 %v959, %v959
        %v968 = vmul.f32 %v960, %v960
        %v969 = vmul.f32 %v961, %v961
        %v970 = vmul.f32 %v962, %v962
        %v971 = vsub.f32 %v963, %v967
        %v972 = vsub.f32 %v964, %v968
        %v973 = vsub.f32 %v965, %v969
        %v974 = vsub.f32 %v966, %v970
        %v975 = vmax.f32 %v971, 0.0
        %v976 = vmax.f32 %v972, 0.0
        %v977 = vmax.f32 %v973, 0.0
        %v978 = vmax.f32 %v974, 0.0
        %v979 = vadd.f32 %v975, 1e-05
        %v980 = vadd.f32 %v976, 1e-05
        %v981 = vadd.f32 %v977, 1e-05
        %v982 = vadd.f32 %v978, 1e-05
        %v983 = vrsqrt.pop %v979
        %v984 = vrsqrt.pop %v980
        %v985 = vrsqrt.pop %v981
        %v986 = vrsqrt.pop %v982
        %988 = vset.pattern.permute.xlu0 0
        %989 = vperm.xlu0 %988, %v959
        %v990 = vpop.permute.xlu0 %989
        %993 = vset.pattern.permute.xlu0 0
        %994 = vperm.xlu0 %993, %v960
        %v995 = vpop.permute.xlu0 %994
        %998 = vset.pattern.permute.xlu0 0
        %999 = vperm.xlu0 %998, %v961
        %v1000 = vpop.permute.xlu0 %999
        %1003 = vset.pattern.permute.xlu0 0
        %1004 = vperm.xlu0 %1003, %v962
        %v1005 = vpop.permute.xlu0 %1004
        %v1007 = vsub.f32 %v722, %v990
        %v1008 = vsub.f32 %v724, %v990
        %v1009 = vsub.f32 %v726, %v995
        %v1010 = vsub.f32 %v728, %v995
        %v1011 = vsub.f32 %v732, %v1000
        %v1012 = vsub.f32 %v734, %v1000
        %v1013 = vsub.f32 %v736, %v1005
        %v1014 = vsub.f32 %v738, %v1005
        %v1015 = vld [vmem:[%s6] sm:$0xff]
        %v1016 = vld [vmem:[%s6 + $0x8] sm:$0xff]
        %v1017 = vld [vmem:[%s6 + $0x10] sm:$0xff]
        %v1018 = vld [vmem:[%s6 + $0x18] sm:$0xff]
        %v1019 = vmul.f32 %v983, %v1015
        %v1020 = vmul.f32 %v984, %v1016
        %v1021 = vmul.f32 %v985, %v1017
        %v1022 = vmul.f32 %v986, %v1018
        %1024 = vset.pattern.permute.xlu0 0
        %1025 = vperm.xlu0 %1024, %v1019
        %v1026 = vpop.permute.xlu0 %1025
        %1029 = vset.pattern.permute.xlu0 0
        %1030 = vperm.xlu0 %1029, %v1020
        %v1031 = vpop.permute.xlu0 %1030
        %1034 = vset.pattern.permute.xlu0 0
        %1035 = vperm.xlu0 %1034, %v1021
        %v1036 = vpop.permute.xlu0 %1035
        %1039 = vset.pattern.permute.xlu0 0
        %1040 = vperm.xlu0 %1039, %v1022
        %v1041 = vpop.permute.xlu0 %1040
        %v1043 = vmul.f32 %v1007, %v1026
        %v1044 = vmul.f32 %v1008, %v1026
        %v1045 = vmul.f32 %v1009, %v1031
        %v1046 = vmul.f32 %v1010, %v1031
        %v1047 = vmul.f32 %v1011, %v1036
        %v1048 = vmul.f32 %v1012, %v1036
        %v1049 = vmul.f32 %v1013, %v1041
        %v1050 = vmul.f32 %v1014, %v1041
        %v1051 = vld [vmem:[%s7] sm:$0xff]
        %v1052 = vld [vmem:[%s7 + $0x8] sm:$0xff]
        %v1053 = vld [vmem:[%s7 + $0x10] sm:$0xff]
        %v1054 = vld [vmem:[%s7 + $0x18] sm:$0xff]
        %1056 = vset.pattern.permute.xlu0 0
        %1057 = vperm.xlu0 %1056, %v1051
        %v1058 = vpop.permute.xlu0 %1057
        %1061 = vset.pattern.permute.xlu0 0
        %1062 = vperm.xlu0 %1061, %v1052
        %v1063 = vpop.permute.xlu0 %1062
        %1066 = vset.pattern.permute.xlu0 0
        %1067 = vperm.xlu0 %1066, %v1053
        %v1068 = vpop.permute.xlu0 %1067
        %1071 = vset.pattern.permute.xlu0 0
        %1072 = vperm.xlu0 %1071, %v1054
        %v1073 = vpop.permute.xlu0 %1072
        %v1075 = vadd.f32 %v1043, %v1058
        %v1076 = vadd.f32 %v1044, %v1058
        %v1077 = vadd.f32 %v1045, %v1063
        %v1078 = vadd.f32 %v1046, %v1063
        %v1079 = vadd.f32 %v1047, %v1068
        %v1080 = vadd.f32 %v1048, %v1068
        %v1081 = vadd.f32 %v1049, %v1073
        %v1082 = vadd.f32 %v1050, %v1073
        %v1083 = vxor.u32 %v1075, 2147483648
        %v1084 = vxor.u32 %v1076, 2147483648
        %v1085 = vxor.u32 %v1077, 2147483648
        %v1086 = vxor.u32 %v1078, 2147483648
        %v1087 = vxor.u32 %v1079, 2147483648
        %v1088 = vxor.u32 %v1080, 2147483648
        %v1089 = vxor.u32 %v1081, 2147483648
        %v1090 = vxor.u32 %v1082, 2147483648
        %v1091 = vmul.f32 %v1083, 1.442695
        %v1092 = vpow.pop %v1091
        %v1093 = vmul.f32 %v1084, 1.442695
        %v1094 = vpow.pop %v1093
        %v1095 = vmul.f32 %v1085, 1.442695
        %v1096 = vpow.pop %v1095
        %v1097 = vmul.f32 %v1086, 1.442695
        %v1098 = vpow.pop %v1097
        %v1099 = vmul.f32 %v1087, 1.442695
        %v1100 = vpow.pop %v1099
        %v1101 = vmul.f32 %v1088, 1.442695
        %v1102 = vpow.pop %v1101
        %v1103 = vmul.f32 %v1089, 1.442695
        %v1104 = vpow.pop %v1103
        %v1105 = vmul.f32 %v1090, 1.442695
        %v1106 = vpow.pop %v1105
        %v1107 = vadd.f32 %v1092, 1.0
        %v1108 = vadd.f32 %v1094, 1.0
        %v1109 = vadd.f32 %v1096, 1.0
        %v1110 = vadd.f32 %v1098, 1.0
        %v1111 = vadd.f32 %v1100, 1.0
        %v1112 = vadd.f32 %v1102, 1.0
        %v1113 = vadd.f32 %v1104, 1.0
        %v1114 = vadd.f32 %v1106, 1.0
        %v1115 = vrcp.pop %v1107
        %v1116 = vmul.f32 1.0, %v1115
        %v1117 = vrcp.pop %v1108
        %v1118 = vmul.f32 1.0, %v1117
        %v1119 = vrcp.pop %v1109
        %v1120 = vmul.f32 1.0, %v1119
        %v1121 = vrcp.pop %v1110
        %v1122 = vmul.f32 1.0, %v1121
        %v1123 = vrcp.pop %v1111
        %v1124 = vmul.f32 1.0, %v1123
        %v1125 = vrcp.pop %v1112
        %v1126 = vmul.f32 1.0, %v1125
        %v1127 = vrcp.pop %v1113
        %v1128 = vmul.f32 1.0, %v1127
        %v1129 = vrcp.pop %v1114
        %v1130 = vmul.f32 1.0, %v1129
        %v1131 = vmul.f32 %v1075, %v1116
        %v1132 = vmul.f32 %v1076, %v1118
        %v1133 = vmul.f32 %v1077, %v1120
        %v1134 = vmul.f32 %v1078, %v1122
        %v1135 = vmul.f32 %v1079, %v1124
        %v1136 = vmul.f32 %v1080, %v1126
        %v1137 = vmul.f32 %v1081, %v1128
        %v1138 = vmul.f32 %v1082, %v1130
        %1139 = vst [vmem:[%s377] sm:$0xff] %v1131
        %1140 = vst [vmem:[%s377 + $0x8] sm:$0xff] %v1132
        %1141 = vst [vmem:[%s377 + $0x10] sm:$0xff] %v1133
        %1142 = vst [vmem:[%s377 + $0x18] sm:$0xff] %v1134
        %1143 = vst [vmem:[%s377 + $0x20] sm:$0xff] %v1135
        %1144 = vst [vmem:[%s377 + $0x28] sm:$0xff] %v1136
        %1145 = vst [vmem:[%s377 + $0x30] sm:$0xff] %v1137
        %1146 = vst [vmem:[%s377 + $0x38] sm:$0xff] %v1138
        %s1147 = sand.u32 %s250, 1
        %s1148 = scalar_lea.sflag [#allocation4], %s1147
        %s1149 = sand.u32 %s250, 1
        %s1150 = smul.addr %s1149, 64
        %s1151 = scalar_lea.vmem [#allocation5], %s1150
        // Predicated region
        $region65: #{tpu_custom_call.1} parent=59 // pred_check
          %p1152 = pneg %p260
        $region66: #{tpu_custom_call.1} parent=59 // pred_check_branch
          %1154 = sbr.rel (%p1152) target = $region68
        $region67: #{tpu_custom_call.1} parent=59 // pred_region
          %s1156 = ssub.s32 1024, 1024
          %1157 = vsyncadd %s1148, %s1156
          %s1158 = smul.addr %s27, 8
          %s1159 = smul.addr %s1158, 128
          %s1160 = scalar_lea.hbm %s10, %s1159
          %s1161 = sshll.u32 %s1151, 4
          %s1162 = int_to_ptr.vmem [resolvable:$true] %s1161
          %1167 = dma.vmem_to_hbm [thread:$0]  %s1162, 1024, %s1160, %s1148, 256, 256, 16
        $region68: #{tpu_custom_call.1} parent=59 // pred_fallthru
          _
      $region60: #{tpu_custom_call.1} parent=5 // pred_fallthru
        _
      %p1168 = scmp.le.s32.totalorder 2, %s22
      // Predicated region
      $region69: #{tpu_custom_call.1} parent=5 // pred_check
        %p1169 = pneg %p1168
      $region70: #{tpu_custom_call.1} parent=5 // pred_check_branch
        %1171 = sbr.rel (%p1169) target = $region72
      $region71: #{tpu_custom_call.1} parent=5 // pred_region
        %s1172 = ssub.s32 %s22, 2
        // Predicated region
        $region73: #{tpu_custom_call.1} parent=71 // pred_check
          %p1173 = pneg %p266
        $region74: #{tpu_custom_call.1} parent=71 // pred_check_branch
          %1175 = sbr.rel (%p1173) target = $region76
        $region75: #{tpu_custom_call.1} parent=71 // pred_region
          %s1176 = sand.u32 %s251, 1
          %s1177 = scalar_lea.sflag [#allocation4], %s1176
          %s1178 = sand.u32 %s251, 1
          %s1179 = smul.addr %s1178, 64
          %s1180 = scalar_lea.vmem [#allocation5], %s1179
          %1181 = dma.done %s1177, 1024
        $region76: #{tpu_custom_call.1} parent=71 // pred_fallthru
          _
      $region72: #{tpu_custom_call.1} parent=5 // pred_fallthru
        _
    $region6: #{tpu_custom_call.1} parent=1 // loop_footer
      %s26 = sadd.s32 1, %s22
    $region7: #{tpu_custom_call.1} parent=1 // loop_footer_branch
      %21 = sbr.rel target = $region3
    $region8: #{tpu_custom_call.1} parent=1 // loop_exit
      _
    %1182 = vsyncpa [#allocation3], 1
    %s1183 = scalar_lea.sflag [#allocation3], 1
    %1184 = vsyncpa %s1183, 1
    %1185 = vsyncpa [#allocation4], 1
    %s1186 = scalar_lea.sflag [#allocation4], 1
    %1187 = vsyncpa %s1186, 1

</llo_original>
